<compile_context>
chip_gen: v7x
topology: tpu7x:2x2x1
jax: 0.10.0
libtpu: 0.0.40
codegen_flags: <defaults>
</compile_context>

<pallas_src>
import functools
import math

import jax
import jax.numpy as jnp
from jax import lax
from jax.experimental import pallas as pl
from jax.experimental.pallas import tpu as pltpu


# ---------------------------------------------------------------------------
# Fused Pallas kernel: W_0 projection + softmax + memory propagation + rank sum
# ---------------------------------------------------------------------------
def fused_rule_kernel(x_ref, w_ref, b_ref, a_ref, mem0_ref, out_ref, *,
                      num_steps, num_operators, rank, batch, rb_pad):
    E = mem0_ref.shape[1]

    # (1) projection + softmax for every (t, rank, batch) row in ONE matmul.
    #     Row layout: time step t occupies the aligned sublane group
    #     [t*rb_pad : (t+1)*rb_pad); rows within a step ordered rb = r*batch + b
    #     (identical ordering to the memory block below).
    x = x_ref[...]                                                   # (T*RBp, 2H)
    logits = jnp.dot(x, w_ref[...], preferred_element_type=jnp.float32)
    logits = logits + b_ref[...]                                     # (T*RBp, K)
    m = jnp.max(logits, axis=-1, keepdims=True)
    e = jnp.exp(logits - m)
    attn = e / jnp.sum(e, axis=-1, keepdims=True)                    # exact softmax

    # (2) memory propagation: one wide matmul per step over all operators/ranks.
    #     Adjacency arrives bf16 (0/1 exact) and is upcast once, outside the
    #     time loop, so the propagation stays f32 like the PyTorch reference.
    a_cat = a_ref[...].astype(jnp.float32)                           # (E, NOp*E)
    mem = mem0_ref[...]                                              # (RBp, E) f32
    # num_steps is tiny and static -> full unroll.  If it grows, switch to
    # lax.fori_loop(..., unroll=True) to bound vreg live ranges.
    for t in range(num_steps):
        w_t = attn[t * rb_pad:(t + 1) * rb_pad, :]                   # (RBp, K)
        prod = jnp.dot(mem, a_cat,
                       preferred_element_type=jnp.float32)           # (RBp, NOp*E)
        acc = mem * w_t[:, num_operators:num_operators + 1]          # "stay" operator
        for op in range(num_operators):
            # static, 128-aligned lane slice of the wide matmul result
            acc = acc + prod[:, op * E:(op + 1) * E] * w_t[:, op:op + 1]
        mem = acc

    # (3) per-rank row normalization (exact divide, matches torch) + rank sum.
    norm = jnp.maximum(1e-20, jnp.sum(mem, axis=1, keepdims=True))
    mem = mem / norm
    out = mem[0:batch, :]
    for r in range(1, rank):
        out = out + mem[r * batch:(r + 1) * batch, :]
    out_ref[...] = out


# ---------------------------------------------------------------------------
# Pallas wrapper
# ---------------------------------------------------------------------------
def rule_miner_pallas(x_proj, W0, b0, a_cat, mem0, *, num_steps, num_operators,
                      rank, batch, rb_pad):
    TRB, H2 = x_proj.shape
    K = W0.shape[1]
    E = mem0.shape[1]
    NOpE = a_cat.shape[1]

    kernel = functools.partial(
        fused_rule_kernel, num_steps=num_steps, num_operators=num_operators,
        rank=rank, batch=batch, rb_pad=rb_pad)

    flops = 2 * TRB * H2 * K + 2 * num_steps * rb_pad * E * NOpE
    bytes_accessed = (x_proj.size * 4 + W0.size * 4 + b0.size * 4
                      + a_cat.size * 2 + mem0.size * 4 + batch * E * 4)
    cost = pl.CostEstimate(flops=flops, transcendentals=TRB * K,
                           bytes_accessed=bytes_accessed)

    # Everything (bf16 A block is 128 KiB at E=128) fits VMEM easily.  For
    # large E, tile the NOp*E lane axis of a_cat and raise vmem_limit_bytes
    # explicitly (v7x has only 64 MiB VMEM per TensorCore).
    return pl.pallas_call(
        kernel,
        out_shape=jax.ShapeDtypeStruct((batch, E), jnp.float32),
        grid=(1,),
        in_specs=[
            pl.BlockSpec((TRB, H2), lambda i: (0, 0)),
            pl.BlockSpec((H2, K), lambda i: (0, 0)),
            pl.BlockSpec((1, K), lambda i: (0, 0)),
            pl.BlockSpec((E, NOpE), lambda i: (0, 0)),
            pl.BlockSpec((rb_pad, E), lambda i: (0, 0)),
        ],
        out_specs=pl.BlockSpec((batch, E), lambda i: (0, 0)),
        compiler_params=pltpu.CompilerParams(
            dimension_semantics=("arbitrary",)),
        cost_estimate=cost,
    )(x_proj, W0, b0, a_cat, mem0)


# ---------------------------------------------------------------------------
# Plain-JAX glue: bidirectional LSTM (PyTorch gate order i, f, g, o), vmapped
# over ranks so all ranks share one batched scan.
# ---------------------------------------------------------------------------
def _lstm_scan(x, h0, c0, Wih, Whh, bih, bhh):
    def step(carry, xt):
        h, c = carry
        gates = xt @ Wih.T + h @ Whh.T + bih + bhh
        i, f, g, o = jnp.split(gates, 4, axis=-1)
        i = jax.nn.sigmoid(i)
        f = jax.nn.sigmoid(f)
        g = jnp.tanh(g)
        o = jax.nn.sigmoid(o)
        c = f * c + i * g
        h = o * jnp.tanh(c)
        return (h, c), h

    _, hs = lax.scan(step, (h0, c0), x)
    return hs                           # (T, B, H)


def bilstm(x, p):
    T, B, _ = x.shape
    H = p["Whh_f"].shape[1]
    h0 = jnp.zeros((B, H), jnp.float32)
    c0 = jnp.zeros((B, H), jnp.float32)
    h_f = _lstm_scan(x, h0, c0, p["Wih_f"], p["Whh_f"], p["bih_f"], p["bhh_f"])
    h_b = _lstm_scan(x[::-1], h0, c0, p["Wih_b"], p["Whh_b"], p["bih_b"], p["bhh_b"])[::-1]
    return jnp.concatenate([h_f, h_b], axis=-1)     # (T, B, 2H)


# ---------------------------------------------------------------------------
# Parameter init (deterministic; mirrors RuleMiner.__init__ shapes, ranks stacked)
# ---------------------------------------------------------------------------
def init_params(key, rank, num_embeddings, query_dim, hidden, num_operators):
    k_emb, k_w0, k_lstm = jax.random.split(key, 3)

    # _random_uniform_unit: uniform(-6/sqrt(cols), 6/sqrt(cols)), row-normalized
    bound = 6.0 / math.sqrt(query_dim)
    emb = jax.random.uniform(k_emb, (num_embeddings, query_dim),
                             minval=-bound, maxval=bound, dtype=jnp.float32)
    emb = emb / jnp.linalg.norm(emb, axis=1, keepdims=True)

    W0 = jax.random.normal(k_w0, (2 * hidden, num_operators + 1), dtype=jnp.float32)
    b0 = jnp.zeros((1, num_operators + 1), jnp.float32)

    k = 1.0 / math.sqrt(hidden)
    shapes = {
        "Wih_f": (rank, 4 * hidden, query_dim),
        "Whh_f": (rank, 4 * hidden, hidden),
        "bih_f": (rank, 4 * hidden),
        "bhh_f": (rank, 4 * hidden),
        "Wih_b": (rank, 4 * hidden, query_dim),
        "Whh_b": (rank, 4 * hidden, hidden),
        "bih_b": (rank, 4 * hidden),
        "bhh_b": (rank, 4 * hidden),
    }
    ks = jax.random.split(k_lstm, len(shapes))
    lstm = {name: jax.random.uniform(kk, shape, minval=-k, maxval=k,
                                     dtype=jnp.float32)
            for kk, (name, shape) in zip(ks, shapes.items())}
    return emb, W0, b0, lstm


# ---------------------------------------------------------------------------
# Forward (eval mode)
# ---------------------------------------------------------------------------
def rule_miner_forward(params, queries, heads, ops_dense, num_steps):
    emb, W0, b0, lstm = params
    rank = lstm["Whh_f"].shape[0]
    B = queries.shape[0]
    num_operators, E, _ = ops_dense.shape
    rb = rank * B
    rb_pad = ((rb + 7) // 8) * 8          # pad rank*B rows up to the f32 sublane tile

    # query embedding, repeated over time steps: (T, B, Dq)
    qe = emb[queries]
    x = jnp.broadcast_to(qe[None], (num_steps, B, qe.shape[-1])).astype(jnp.float32)

    # batched bidirectional LSTM over ranks -> (rank, T, B, 2H)
    rnn_out = jax.vmap(bilstm, in_axes=(None, 0))(x, lstm)

    # projection input: each time step occupies one aligned sublane group,
    # rows within a step ordered rb = r*B + b (matches the memory layout)
    xp = jnp.transpose(rnn_out, (1, 0, 2, 3)).reshape(num_steps, rb, -1)
    xp = jnp.pad(xp, ((0, 0), (0, rb_pad - rb), (0, 0)))
    xp = xp.reshape(num_steps * rb_pad, -1)

    # operators concatenated along the output/lane axis: (E, NOp*E); bf16 (0/1 exact)
    a_cat = jnp.transpose(ops_dense, (1, 0, 2)).reshape(E, num_operators * E)
    a_cat = a_cat.astype(jnp.bfloat16)

    # initial memory: one-hot heads replicated per rank, padded to rb_pad rows
    mem0 = jnp.tile(jax.nn.one_hot(heads, E, dtype=jnp.float32), (rank, 1))
    mem0 = jnp.pad(mem0, ((0, rb_pad - rb), (0, 0)))

    return rule_miner_pallas(xp, W0, b0, a_cat, mem0,
                             num_steps=num_steps, num_operators=num_operators,
                             rank=rank, batch=B, rb_pad=rb_pad)   # (B, E)


# ---------------------------------------------------------------------------
# Pure-JAX reference (eval-mode PyTorch semantics, no Pallas) for validation
# ---------------------------------------------------------------------------
def rule_miner_reference(params, queries, heads, ops_dense, num_steps):
    emb, W0, b0, lstm = params
    rank = lstm["Whh_f"].shape[0]
    B = queries.shape[0]
    num_operators, E, _ = ops_dense.shape

    qe = emb[queries]
    x = jnp.broadcast_to(qe[None], (num_steps, B, qe.shape[-1])).astype(jnp.float32)
    rnn_out = jax.vmap(bilstm, in_axes=(None, 0))(x, lstm)   # (rank, T, B, 2H)

    logits = jnp.zeros((B, E), jnp.float32)
    for r in range(rank):
        attn = jax.nn.softmax(rnn_out[r] @ W0 + b0, axis=-1)   # (T, B, K)
        mem = jax.nn.one_hot(heads, E, dtype=jnp.float32)      # (B, E)
        for t in range(num_steps):
            acc = mem * attn[t, :, num_operators:num_operators + 1]
            for op in range(num_operators):
                acc = acc + (mem @ ops_dense[op]) * attn[t, :, op:op + 1]
            mem = acc
        norm = jnp.maximum(1e-20, jnp.sum(mem, axis=1, keepdims=True))
        logits = logits + mem / norm
    return logits


# ---------------------------------------------------------------------------
if __name__ == "__main__":
    rank = 2
    num_steps = 3
    num_entities = 128
    num_embeddings = 8          # number of relations
    num_operators = 4
    query_embedding_dim = 32
    hidden_size = 32
    batch_size = 2

    key = jax.random.PRNGKey(0)
    pkey, dkey = jax.random.split(key)
    params = init_params(pkey, rank, num_embeddings, query_embedding_dim,
                         hidden_size, num_operators)

    k1, k2, k3 = jax.random.split(dkey, 3)
    queries = jax.random.randint(k1, (batch_size,), 0, num_embeddings)
    heads = jax.random.randint(k2, (batch_size,), 0, num_entities)
    # dense stand-in for the sparse adjacency matrices (one per operator/relation)
    ops_dense = (jax.random.uniform(
        k3, (num_operators, num_entities, num_entities)) < 0.05).astype(jnp.float32)

    fwd = jax.jit(rule_miner_forward, static_argnums=(4,))
    logits = fwd(params, queries, heads, ops_dense, num_steps)
    logits = jax.block_until_ready(logits)

    ref = rule_miner_reference(params, queries, heads, ops_dense, num_steps)
    ref = jax.block_until_ready(ref)

    assert logits.shape == (batch_size, num_entities)
    assert bool(jnp.all(jnp.isfinite(logits)))
    assert bool(jnp.allclose(logits, ref, rtol=1e-2, atol=1e-4)), (
        "pallas kernel disagrees with pure-JAX reference")
    print("KERNEL_OK")
</pallas_src>

<mosaic_0001>
module attributes {stable_mosaic.version = 11 : i64} {
  func.func @fused_rule_kernel(%arg0: i32, %arg1: memref<24x64xf32, #tpu.memory_space<vmem>>, %arg2: memref<64x5xf32, #tpu.memory_space<vmem>>, %arg3: memref<1x5xf32, #tpu.memory_space<vmem>>, %arg4: memref<128x512xbf16, #tpu.memory_space<vmem>>, %arg5: memref<8x128xf32, #tpu.memory_space<vmem>>, %arg6: memref<2x128xf32, #tpu.memory_space<vmem>>) attributes {dimension_semantics = [#tpu.dimension_semantics<arbitrary>], iteration_bounds = array<i64: 1>, scalar_prefetch = 0 : i64, scratch_operands = 0 : i64, tpu.core_type = #tpu.core_type<tc>, window_params = [{pipeline_mode = #tpu.pipeline_mode<synchronous>, transform_indices = @transform_0, window_bounds = array<i64: 24, 64>}, {pipeline_mode = #tpu.pipeline_mode<synchronous>, transform_indices = @transform_1, window_bounds = array<i64: 64, 5>}, {pipeline_mode = #tpu.pipeline_mode<synchronous>, transform_indices = @transform_2, window_bounds = array<i64: 1, 5>}, {pipeline_mode = #tpu.pipeline_mode<synchronous>, transform_indices = @transform_3, window_bounds = array<i64: 128, 512>}, {pipeline_mode = #tpu.pipeline_mode<synchronous>, transform_indices = @transform_4, window_bounds = array<i64: 8, 128>}, {pipeline_mode = #tpu.pipeline_mode<synchronous>, transform_indices = @transform_5, window_bounds = array<i64: 2, 128>}]} {
    %c0 = arith.constant 0 : index
    %c0_0 = arith.constant 0 : index
    %0 = vector.load %arg1[%c0, %c0_0] : memref<24x64xf32, #tpu.memory_space<vmem>>, vector<24x64xf32>
    %c0_1 = arith.constant 0 : index
    %c0_2 = arith.constant 0 : index
    %1 = vector.load %arg2[%c0_1, %c0_2] : memref<64x5xf32, #tpu.memory_space<vmem>>, vector<64x5xf32>
    %cst = arith.constant dense<0.000000e+00> : vector<24x5xf32>
    %2 = tpu.matmul %0, %1, %cst {dimension_numbers = #tpu.dot_dimension_numbers<[1], [0], [0], [1], [0, 0, 1, 1], [], []>} : vector<24x64xf32>, vector<64x5xf32>, vector<24x5xf32> -> vector<24x5xf32>
    %c0_3 = arith.constant 0 : index
    %c0_4 = arith.constant 0 : index
    %3 = vector.load %arg3[%c0_3, %c0_4] : memref<1x5xf32, #tpu.memory_space<vmem>>, vector<1x5xf32>
    %4 = vector.broadcast %3 : vector<1x5xf32> to vector<24x5xf32>
    %5 = arith.addf %2, %4 : vector<24x5xf32>
    %cst_5 = arith.constant dense<0xFF800000> : vector<24xf32>
    %6 = vector.multi_reduction <maximumf>, %5, %cst_5 [1] : vector<24x5xf32> to vector<24xf32>
    %7 = vector.shape_cast %6 : vector<24xf32> to vector<24x1xf32>
    %8 = vector.broadcast %7 : vector<24x1xf32> to vector<24x5xf32>
    %9 = arith.subf %5, %8 : vector<24x5xf32>
    %10 = math.exp %9 : vector<24x5xf32>
    %cst_6 = arith.constant dense<0.000000e+00> : vector<24xf32>
    %11 = vector.multi_reduction <add>, %10, %cst_6 [1] : vector<24x5xf32> to vector<24xf32>
    %12 = vector.shape_cast %11 : vector<24xf32> to vector<24x1xf32>
    %13 = vector.broadcast %12 : vector<24x1xf32> to vector<24x5xf32>
    %14 = arith.divf %10, %13 : vector<24x5xf32>
    %c0_7 = arith.constant 0 : index
    %c0_8 = arith.constant 0 : index
    %15 = vector.load %arg4[%c0_7, %c0_8] : memref<128x512xbf16, #tpu.memory_space<vmem>>, vector<128x512xbf16>
    %16 = arith.extf %15 : vector<128x512xbf16> to vector<128x512xf32>
    %c0_9 = arith.constant 0 : index
    %c0_10 = arith.constant 0 : index
    %17 = vector.load %arg5[%c0_9, %c0_10] : memref<8x128xf32, #tpu.memory_space<vmem>>, vector<8x128xf32>
    %18 = vector.extract_strided_slice %14 {offsets = [0, 0], sizes = [8, 5], strides = [1, 1]} : vector<24x5xf32> to vector<8x5xf32>
    %cst_11 = arith.constant dense<0.000000e+00> : vector<8x512xf32>
    %19 = tpu.matmul %17, %16, %cst_11 {dimension_numbers = #tpu.dot_dimension_numbers<[1], [0], [0], [1], [0, 0, 1, 1], [], []>} : vector<8x128xf32>, vector<128x512xf32>, vector<8x512xf32> -> vector<8x512xf32>
    %20 = vector.extract_strided_slice %18 {offsets = [0, 4], sizes = [8, 1], strides = [1, 1]} : vector<8x5xf32> to vector<8x1xf32>
    %21 = vector.broadcast %20 : vector<8x1xf32> to vector<8x128xf32>
    %22 = arith.mulf %17, %21 : vector<8x128xf32>
    %23 = vector.extract_strided_slice %19 {offsets = [0, 0], sizes = [8, 128], strides = [1, 1]} : vector<8x512xf32> to vector<8x128xf32>
    %24 = vector.extract_strided_slice %18 {offsets = [0, 0], sizes = [8, 1], strides = [1, 1]} : vector<8x5xf32> to vector<8x1xf32>
    %25 = vector.broadcast %24 : vector<8x1xf32> to vector<8x128xf32>
    %26 = arith.mulf %23, %25 : vector<8x128xf32>
    %27 = arith.addf %22, %26 : vector<8x128xf32>
    %28 = vector.extract_strided_slice %19 {offsets = [0, 128], sizes = [8, 128], strides = [1, 1]} : vector<8x512xf32> to vector<8x128xf32>
    %29 = vector.extract_strided_slice %18 {offsets = [0, 1], sizes = [8, 1], strides = [1, 1]} : vector<8x5xf32> to vector<8x1xf32>
    %30 = vector.broadcast %29 : vector<8x1xf32> to vector<8x128xf32>
    %31 = arith.mulf %28, %30 : vector<8x128xf32>
    %32 = arith.addf %27, %31 : vector<8x128xf32>
    %33 = vector.extract_strided_slice %19 {offsets = [0, 256], sizes = [8, 128], strides = [1, 1]} : vector<8x512xf32> to vector<8x128xf32>
    %34 = vector.extract_strided_slice %18 {offsets = [0, 2], sizes = [8, 1], strides = [1, 1]} : vector<8x5xf32> to vector<8x1xf32>
    %35 = vector.broadcast %34 : vector<8x1xf32> to vector<8x128xf32>
    %36 = arith.mulf %33, %35 : vector<8x128xf32>
    %37 = arith.addf %32, %36 : vector<8x128xf32>
    %38 = vector.extract_strided_slice %19 {offsets = [0, 384], sizes = [8, 128], strides = [1, 1]} : vector<8x512xf32> to vector<8x128xf32>
    %39 = vector.extract_strided_slice %18 {offsets = [0, 3], sizes = [8, 1], strides = [1, 1]} : vector<8x5xf32> to vector<8x1xf32>
    %40 = vector.broadcast %39 : vector<8x1xf32> to vector<8x128xf32>
    %41 = arith.mulf %38, %40 : vector<8x128xf32>
    %42 = arith.addf %37, %41 : vector<8x128xf32>
    %43 = vector.extract_strided_slice %14 {offsets = [8, 0], sizes = [8, 5], strides = [1, 1]} : vector<24x5xf32> to vector<8x5xf32>
    %cst_12 = arith.constant dense<0.000000e+00> : vector<8x512xf32>
    %44 = tpu.matmul %42, %16, %cst_12 {dimension_numbers = #tpu.dot_dimension_numbers<[1], [0], [0], [1], [0, 0, 1, 1], [], []>} : vector<8x128xf32>, vector<128x512xf32>, vector<8x512xf32> -> vector<8x512xf32>
    %45 = vector.extract_strided_slice %43 {offsets = [0, 4], sizes = [8, 1], strides = [1, 1]} : vector<8x5xf32> to vector<8x1xf32>
    %46 = vector.broadcast %45 : vector<8x1xf32> to vector<8x128xf32>
    %47 = arith.mulf %42, %46 : vector<8x128xf32>
    %48 = vector.extract_strided_slice %44 {offsets = [0, 0], sizes = [8, 128], strides = [1, 1]} : vector<8x512xf32> to vector<8x128xf32>
    %49 = vector.extract_strided_slice %43 {offsets = [0, 0], sizes = [8, 1], strides = [1, 1]} : vector<8x5xf32> to vector<8x1xf32>
    %50 = vector.broadcast %49 : vector<8x1xf32> to vector<8x128xf32>
    %51 = arith.mulf %48, %50 : vector<8x128xf32>
    %52 = arith.addf %47, %51 : vector<8x128xf32>
    %53 = vector.extract_strided_slice %44 {offsets = [0, 128], sizes = [8, 128], strides = [1, 1]} : vector<8x512xf32> to vector<8x128xf32>
    %54 = vector.extract_strided_slice %43 {offsets = [0, 1], sizes = [8, 1], strides = [1, 1]} : vector<8x5xf32> to vector<8x1xf32>
    %55 = vector.broadcast %54 : vector<8x1xf32> to vector<8x128xf32>
    %56 = arith.mulf %53, %55 : vector<8x128xf32>
    %57 = arith.addf %52, %56 : vector<8x128xf32>
    %58 = vector.extract_strided_slice %44 {offsets = [0, 256], sizes = [8, 128], strides = [1, 1]} : vector<8x512xf32> to vector<8x128xf32>
    %59 = vector.extract_strided_slice %43 {offsets = [0, 2], sizes = [8, 1], strides = [1, 1]} : vector<8x5xf32> to vector<8x1xf32>
    %60 = vector.broadcast %59 : vector<8x1xf32> to vector<8x128xf32>
    %61 = arith.mulf %58, %60 : vector<8x128xf32>
    %62 = arith.addf %57, %61 : vector<8x128xf32>
    %63 = vector.extract_strided_slice %44 {offsets = [0, 384], sizes = [8, 128], strides = [1, 1]} : vector<8x512xf32> to vector<8x128xf32>
    %64 = vector.extract_strided_slice %43 {offsets = [0, 3], sizes = [8, 1], strides = [1, 1]} : vector<8x5xf32> to vector<8x1xf32>
    %65 = vector.broadcast %64 : vector<8x1xf32> to vector<8x128xf32>
    %66 = arith.mulf %63, %65 : vector<8x128xf32>
    %67 = arith.addf %62, %66 : vector<8x128xf32>
    %68 = vector.extract_strided_slice %14 {offsets = [16, 0], sizes = [8, 5], strides = [1, 1]} : vector<24x5xf32> to vector<8x5xf32>
    %cst_13 = arith.constant dense<0.000000e+00> : vector<8x512xf32>
    %69 = tpu.matmul %67, %16, %cst_13 {dimension_numbers = #tpu.dot_dimension_numbers<[1], [0], [0], [1], [0, 0, 1, 1], [], []>} : vector<8x128xf32>, vector<128x512xf32>, vector<8x512xf32> -> vector<8x512xf32>
    %70 = vector.extract_strided_slice %68 {offsets = [0, 4], sizes = [8, 1], strides = [1, 1]} : vector<8x5xf32> to vector<8x1xf32>
    %71 = vector.broadcast %70 : vector<8x1xf32> to vector<8x128xf32>
    %72 = arith.mulf %67, %71 : vector<8x128xf32>
    %73 = vector.extract_strided_slice %69 {offsets = [0, 0], sizes = [8, 128], strides = [1, 1]} : vector<8x512xf32> to vector<8x128xf32>
    %74 = vector.extract_strided_slice %68 {offsets = [0, 0], sizes = [8, 1], strides = [1, 1]} : vector<8x5xf32> to vector<8x1xf32>
    %75 = vector.broadcast %74 : vector<8x1xf32> to vector<8x128xf32>
    %76 = arith.mulf %73, %75 : vector<8x128xf32>
    %77 = arith.addf %72, %76 : vector<8x128xf32>
    %78 = vector.extract_strided_slice %69 {offsets = [0, 128], sizes = [8, 128], strides = [1, 1]} : vector<8x512xf32> to vector<8x128xf32>
    %79 = vector.extract_strided_slice %68 {offsets = [0, 1], sizes = [8, 1], strides = [1, 1]} : vector<8x5xf32> to vector<8x1xf32>
    %80 = vector.broadcast %79 : vector<8x1xf32> to vector<8x128xf32>
    %81 = arith.mulf %78, %80 : vector<8x128xf32>
    %82 = arith.addf %77, %81 : vector<8x128xf32>
    %83 = vector.extract_strided_slice %69 {offsets = [0, 256], sizes = [8, 128], strides = [1, 1]} : vector<8x512xf32> to vector<8x128xf32>
    %84 = vector.extract_strided_slice %68 {offsets = [0, 2], sizes = [8, 1], strides = [1, 1]} : vector<8x5xf32> to vector<8x1xf32>
    %85 = vector.broadcast %84 : vector<8x1xf32> to vector<8x128xf32>
    %86 = arith.mulf %83, %85 : vector<8x128xf32>
    %87 = arith.addf %82, %86 : vector<8x128xf32>
    %88 = vector.extract_strided_slice %69 {offsets = [0, 384], sizes = [8, 128], strides = [1, 1]} : vector<8x512xf32> to vector<8x128xf32>
    %89 = vector.extract_strided_slice %68 {offsets = [0, 3], sizes = [8, 1], strides = [1, 1]} : vector<8x5xf32> to vector<8x1xf32>
    %90 = vector.broadcast %89 : vector<8x1xf32> to vector<8x128xf32>
    %91 = arith.mulf %88, %90 : vector<8x128xf32>
    %92 = arith.addf %87, %91 : vector<8x128xf32>
    %cst_14 = arith.constant dense<0.000000e+00> : vector<8xf32>
    %93 = vector.multi_reduction <add>, %92, %cst_14 [1] : vector<8x128xf32> to vector<8xf32>
    %94 = vector.shape_cast %93 : vector<8xf32> to vector<8x1xf32>
    %cst_15 = arith.constant 9.99999968E-21 : f32
    %95 = vector.broadcast %cst_15 : f32 to vector<8x1xf32>
    %96 = arith.maximumf %95, %94 : vector<8x1xf32>
    %97 = vector.broadcast %96 : vector<8x1xf32> to vector<8x128xf32>
    %98 = arith.divf %92, %97 : vector<8x128xf32>
    %99 = vector.extract_strided_slice %98 {offsets = [0, 0], sizes = [2, 128], strides = [1, 1]} : vector<8x128xf32> to vector<2x128xf32>
    %100 = vector.extract_strided_slice %98 {offsets = [2, 0], sizes = [2, 128], strides = [1, 1]} : vector<8x128xf32> to vector<2x128xf32>
    %101 = arith.addf %99, %100 : vector<2x128xf32>
    %c0_16 = arith.constant 0 : index
    %c0_17 = arith.constant 0 : index
    %102 = vector.load %arg6[%c0_16, %c0_17] : memref<2x128xf32, #tpu.memory_space<vmem>>, vector<2x128xf32>
    tpu.vector_store %arg6[%c0_16, %c0_17], %101 {strides = array<i32>} : memref<2x128xf32, #tpu.memory_space<vmem>>, vector<2x128xf32>,
    return
  }
  func.func @transform_0(%arg0: i32) -> (i32, i32) {
    %c0_i32 = arith.constant 0 : i32
    %c0_i32_0 = arith.constant 0 : i32
    %c0_i32_1 = arith.constant 0 : i32
    return %c0_i32, %c0_i32_0 : i32, i32
  }
  func.func @transform_1(%arg0: i32) -> (i32, i32) {
    %c0_i32 = arith.constant 0 : i32
    %c0_i32_0 = arith.constant 0 : i32
    %c0_i32_1 = arith.constant 0 : i32
    return %c0_i32, %c0_i32_0 : i32, i32
  }
  func.func @transform_2(%arg0: i32) -> (i32, i32) {
    %c0_i32 = arith.constant 0 : i32
    %c0_i32_0 = arith.constant 0 : i32
    %c0_i32_1 = arith.constant 0 : i32
    return %c0_i32, %c0_i32_0 : i32, i32
  }
  func.func @transform_3(%arg0: i32) -> (i32, i32) {
    %c0_i32 = arith.constant 0 : i32
    %c0_i32_0 = arith.constant 0 : i32
    %c0_i32_1 = arith.constant 0 : i32
    return %c0_i32, %c0_i32_0 : i32, i32
  }
  func.func @transform_4(%arg0: i32) -> (i32, i32) {
    %c0_i32 = arith.constant 0 : i32
    %c0_i32_0 = arith.constant 0 : i32
    %c0_i32_1 = arith.constant 0 : i32
    return %c0_i32, %c0_i32_0 : i32, i32
  }
  func.func @transform_5(%arg0: i32) -> (i32, i32) {
    %c0_i32 = arith.constant 0 : i32
    %c0_i32_0 = arith.constant 0 : i32
    %c0_i32_1 = arith.constant 0 : i32
    return %c0_i32, %c0_i32_0 : i32, i32
  }
}

</mosaic_0001>

<llo_original>
// kernel: custom-call.2
$region0: #{custom-call.2}
  %s0 = inlined_call_operand.vmem [shape: bf16[2,2,32], index: 0, kind: output, shape index: {}]

// kernel: custom-call.3
$region0: #{custom-call.3}
  %s0 = inlined_call_operand.vmem [shape: f32[2,2,32], index: 0, kind: output, shape index: {}]

// kernel: rule_miner_forward.1
$region0: #{rule_miner_forward.1}
  #allocation0 [shape = 'u32[]', space=smem, size = 0x4, offset = 0x4, fixed_abs, tag = 'smem constant byte address 0x4 - core index']
  #allocation1 [shape = 'u32[144,128]{1,0:T(1,128)}', space=vmem, size = 0x12000, scoped, tag = 'internal scratch']
  %s0 = inlined_call_operand.vmem [shape: f32[24,64], index: 0, kind: input, shape index: {}]
  %s1 = inlined_call_operand.vmem [shape: f32[64,5], index: 1, kind: input, shape index: {}]
  %s2 = inlined_call_operand.vmem [shape: f32[1,5], index: 2, kind: input, shape index: {}]
  %s3 = inlined_call_operand.vmem [shape: bf16[128,512], index: 3, kind: input, shape index: {}]
  %s4 = inlined_call_operand.vmem [shape: f32[8,128], index: 4, kind: input, shape index: {}]
  %s5 = inlined_call_operand.hbm [shape: f32[2,128], index: 5, kind: output, shape index: {}]
  %s6 = sld [smem:[#allocation0]]
  $region30: #{rule_miner_forward.1} parent=0
    _
  %s8 = ssub.s32 1, %s6
  %s9 = scalar_select 0, %s8, %s6
  $region1: #{rule_miner_forward.1} parent=0
    #allocation2 [shape = 'u8[1024]{0}', space=vmem, size = 0x400, scoped, tag = 'output window, operand 0, single buffered']
    #allocation3 [shape = 's32[1]{0}', space=sflag, size = 0x4, scoped, tag = 'scoped memory for rule_miner_forward.1']
    %10 = vsyncpa [#allocation3], 0
    // Predicated region
    $region2: #{rule_miner_forward.1} parent=1 // pred_check
      _
    $region3: #{rule_miner_forward.1} parent=1 // pred_check_branch
      %12 = sbr.rel (0) target = $region5
    $region4: #{rule_miner_forward.1} parent=1 // pred_region
      _
    $region5: #{rule_miner_forward.1} parent=1 // pred_fallthru
      _
    // Predicated region
    $region6: #{rule_miner_forward.1} parent=1 // pred_check
      _
    $region7: #{rule_miner_forward.1} parent=1 // pred_check_branch
      %14 = sbr.rel (0) target = $region9
    $region8: #{rule_miner_forward.1} parent=1 // pred_region
      _
    $region9: #{rule_miner_forward.1} parent=1 // pred_fallthru
      _
    // Predicated region
    $region10: #{rule_miner_forward.1} parent=1 // pred_check
      _
    $region11: #{rule_miner_forward.1} parent=1 // pred_check_branch
      %16 = sbr.rel (0) target = $region13
    $region12: #{rule_miner_forward.1} parent=1 // pred_region
      _
    $region13: #{rule_miner_forward.1} parent=1 // pred_fallthru
      _
    // Predicated region
    $region14: #{rule_miner_forward.1} parent=1 // pred_check
      _
    $region15: #{rule_miner_forward.1} parent=1 // pred_check_branch
      %18 = sbr.rel (0) target = $region17
    $region16: #{rule_miner_forward.1} parent=1 // pred_region
      _
    $region17: #{rule_miner_forward.1} parent=1 // pred_fallthru
      _
    // Predicated region
    $region18: #{rule_miner_forward.1} parent=1 // pred_check
      _
    $region19: #{rule_miner_forward.1} parent=1 // pred_check_branch
      %20 = sbr.rel (0) target = $region21
    $region20: #{rule_miner_forward.1} parent=1 // pred_region
      _
    $region21: #{rule_miner_forward.1} parent=1 // pred_fallthru
      _
    %v21 = vld [vmem:[%s0] sm:$0xff]
    %v22 = vld [vmem:[%s0 + $0x8] sm:$0xff]
    %v23 = vld [vmem:[%s0 + $0x10] sm:$0xff]
    %v24 = vld [vmem:[%s1] sm:$0xff]
    %v25 = vld [vmem:[%s1 + $0x8] sm:$0xff]
    %v26 = vld [vmem:[%s1 + $0x10] sm:$0xff]
    %v27 = vld [vmem:[%s1 + $0x18] sm:$0xff]
    %v28 = vld [vmem:[%s1 + $0x20] sm:$0xff]
    %v29 = vld [vmem:[%s1 + $0x28] sm:$0xff]
    %v30 = vld [vmem:[%s1 + $0x30] sm:$0xff]
    %v31 = vld [vmem:[%s1 + $0x38] sm:$0xff]
    %v32 = vld [vmem:[%s2] sm:$0x1]
    %v34 = vlaneseq
    %v35 = vshrl.u32 %v34, 7
    %v36 = vsub.s32 0, %v35
    %v37 = vrot.slane %v32, %v36
    %vm39 = vcmask 523264
    %v41 = vsel %vm39, %v21, 0
    %v44 = vsel %vm39, %v22, 0
    %v47 = vsel %vm39, %v23, 0
    %49 = vmatprep.subr.mxu0 0.0
    %50 = vmatpush1.msra.mxu0 %v24
    %51 = vmatprep.subr.mxu0 0.0
    %52 = vmatpush1.msra.mxu0 %v25
    %53 = vmatprep.subr.mxu0 0.0
    %54 = vmatpush1.msra.mxu0 %v26
    %55 = vmatprep.subr.mxu0 0.0
    %56 = vmatpush1.msra.mxu0 %v27
    %57 = vmatprep.subr.mxu0 0.0
    %58 = vmatpush1.msra.mxu0 %v28
    %59 = vmatprep.subr.mxu0 0.0
    %60 = vmatpush1.msra.mxu0 %v29
    %61 = vmatprep.subr.mxu0 0.0
    %62 = vmatpush1.msra.mxu0 %v30
    %63 = vmatprep.subr.mxu0 0.0
    %64 = vmatpush1.msra.mxu0 %v31
    %65 = vmatprep.subr.mxu0 0.0
    %66 = vmatpush1.msra.mxu0 0.0
    %67 = vmatprep.subr.mxu0 0.0
    %68 = vmatpush1.msra.mxu0 0.0
    %69 = vmatprep.subr.mxu0 0.0
    %70 = vmatpush1.msra.mxu0 0.0
    %71 = vmatprep.subr.mxu0 0.0
    %72 = vmatpush1.msra.mxu0 0.0
    %73 = vmatprep.subr.mxu0 0.0
    %74 = vmatpush1.msra.mxu0 0.0
    %75 = vmatprep.subr.mxu0 0.0
    %76 = vmatpush1.msra.mxu0 0.0
    %77 = vmatprep.subr.mxu0 0.0
    %78 = vmatpush1.msra.mxu0 0.0
    %79 = vmatprep.subr.mxu0 0.0
    %80 = vmatpush1.msra.mxu0 0.0
    %81 = vmatprep.subr.mxu0 0.0
    %82 = vmatpush1.msra.mxu0 0.0
    %83 = vmatprep.subr.mxu0 0.0
    %84 = vmatpush1.msra.mxu0 0.0
    %85 = vmatprep.subr.mxu0 0.0
    %86 = vmatpush1.msra.mxu0 0.0
    %87 = vmatprep.subr.mxu0 0.0
    %88 = vmatpush1.msra.mxu0 0.0
    %89 = vmatprep.subr.mxu0 0.0
    %90 = vmatpush1.msra.mxu0 0.0
    %91 = vmatprep.subr.mxu0 0.0
    %92 = vmatpush1.msra.mxu0 0.0
    %93 = vmatprep.subr.mxu0 0.0
    %94 = vmatpush1.msra.mxu0 0.0
    %95 = vmatprep.subr.mxu0 0.0
    %96 = vmatpush1.msra.mxu0 0.0
    %97 = vmatprep.subr.mxu0 0.0
    %98 = vmatpush1.msra.mxu0 0.0
    %99 = vmatprep.subr.mxu0 0.0
    %100 = vmatpush1.msra.mxu0 0.0
    %101 = vmatprep.subr.mxu0 0.0
    %102 = vmatpush1.msra.mxu0 0.0
    %103 = vmatprep.subr.mxu0 0.0
    %104 = vmatpush1.msra.mxu0 0.0
    %105 = vmatprep.subr.mxu0 0.0
    %106 = vmatpush1.msra.mxu0 0.0
    %107 = vmatprep.subr.mxu0 0.0
    %108 = vmatpush1.msra.mxu0 0.0
    %109 = vmatprep.subr.mxu0 0.0
    %110 = vmatpush1.msra.mxu0 0.0
    %111 = vmatprep.subr.mxu0 0.0
    %112 = vmatpush1.msra.mxu0 0.0
    %113 = vmatprep.mubr.f32.mxu0 0.0
    %114 = vmatmul.mubr.f32.gmra.mrb[0].mxu0 %v41
    %v115 = vpop.f32.mrb[0].mxu0
    %v116 = vadd.f32 %v37, %v115
    %v117 = vpop.f32.mrb[0].mxu0
    %118 = vmatprep.mubr.f32.mxu0 0.0
    %119 = vmatmul.mubr.f32.gmra.mrb[0].mxu0 %v44
    %v120 = vpop.f32.mrb[0].mxu0
    %v121 = vadd.f32 %v37, %v120
    %v122 = vpop.f32.mrb[0].mxu0
    %123 = vmatprep.mubr.f32.mxu0 0.0
    %124 = vmatmul.mubr.f32.gmra.mrb[0].mxu0 %v47
    %v125 = vpop.f32.mrb[0].mxu0
    %v126 = vadd.f32 %v37, %v125
    %v127 = vpop.f32.mrb[0].mxu0
    %128 = vdwg.mxu0
    %vm129 = vcmask 39936
    %v130 = vsel %vm129, %v116, -inf
    %131 = vmax.xlane.f32.xlu0 %v130
    %v132 = vpop.xlane.xlu0 %131
    %v133 = vsel %vm129, %v121, -inf
    %134 = vmax.xlane.f32.xlu0 %v133
    %v135 = vpop.xlane.xlu0 %134
    %v136 = vsel %vm129, %v126, -inf
    %137 = vmax.xlane.f32.xlu0 %v136
    %v138 = vpop.xlane.xlu0 %137
    %v139 = vsub.f32 %v116, %v132
    %v140 = vsub.f32 %v121, %v135
    %v141 = vsub.f32 %v126, %v138
    %v142 = vmul.f32 %v139, 1.442695
    %v143 = vpow.pop %v142
    %v144 = vmul.f32 %v140, 1.442695
    %v145 = vpow.pop %v144
    %v146 = vmul.f32 %v141, 1.442695
    %v147 = vpow.pop %v146
    %v148 = vsel %vm129, %v143, 0.0
    %149 = vadd.xlane.f32.xlu0 %v148
    %v150 = vpop.xlane.xlu0 %149
    %v151 = vsel %vm129, %v145, 0.0
    %152 = vadd.xlane.f32.xlu0 %v151
    %v153 = vpop.xlane.xlu0 %152
    %v154 = vsel %vm129, %v147, 0.0
    %155 = vadd.xlane.f32.xlu0 %v154
    %v156 = vpop.xlane.xlu0 %155
    %v157 = vrcp.pop %v150
    %v158 = vmul.f32 %v143, %v157
    %v159 = vrcp.pop %v153
    %v160 = vmul.f32 %v145, %v159
    %v161 = vrcp.pop %v156
    %v162 = vmul.f32 %v147, %v161
    %v163 = vld [vmem:[%s3] sm:$0xff]
    %v164 = vld [vmem:[%s3 + $0x8] sm:$0xff]
    %v165 = vld [vmem:[%s3 + $0x10] sm:$0xff]
    %v166 = vld [vmem:[%s3 + $0x18] sm:$0xff]
    %v167 = vld [vmem:[%s3 + $0x20] sm:$0xff]
    %v168 = vld [vmem:[%s3 + $0x28] sm:$0xff]
    %v169 = vld [vmem:[%s3 + $0x30] sm:$0xff]
    %v170 = vld [vmem:[%s3 + $0x38] sm:$0xff]
    %v171 = vld [vmem:[%s3 + $0x40] sm:$0xff]
    %v172 = vld [vmem:[%s3 + $0x48] sm:$0xff]
    %v173 = vld [vmem:[%s3 + $0x50] sm:$0xff]
    %v174 = vld [vmem:[%s3 + $0x58] sm:$0xff]
    %v175 = vld [vmem:[%s3 + $0x60] sm:$0xff]
    %v176 = vld [vmem:[%s3 + $0x68] sm:$0xff]
    %v177 = vld [vmem:[%s3 + $0x70] sm:$0xff]
    %v178 = vld [vmem:[%s3 + $0x78] sm:$0xff]
    %v179 = vld [vmem:[%s3 + $0x80] sm:$0xff]
    %v180 = vld [vmem:[%s3 + $0x88] sm:$0xff]
    %v181 = vld [vmem:[%s3 + $0x90] sm:$0xff]
    %v182 = vld [vmem:[%s3 + $0x98] sm:$0xff]
    %v183 = vld [vmem:[%s3 + $0xa0] sm:$0xff]
    %v184 = vld [vmem:[%s3 + $0xa8] sm:$0xff]
    %v185 = vld [vmem:[%s3 + $0xb0] sm:$0xff]
    %v186 = vld [vmem:[%s3 + $0xb8] sm:$0xff]
    %v187 = vld [vmem:[%s3 + $0xc0] sm:$0xff]
    %v188 = vld [vmem:[%s3 + $0xc8] sm:$0xff]
    %v189 = vld [vmem:[%s3 + $0xd0] sm:$0xff]
    %v190 = vld [vmem:[%s3 + $0xd8] sm:$0xff]
    %v191 = vld [vmem:[%s3 + $0xe0] sm:$0xff]
    %v192 = vld [vmem:[%s3 + $0xe8] sm:$0xff]
    %v193 = vld [vmem:[%s3 + $0xf0] sm:$0xff]
    %v194 = vld [vmem:[%s3 + $0xf8] sm:$0xff]
    %v195 = vunpack.c.l.bf16 %v163
    %v196 = vunpack.c.h.bf16 %v163
    %v197 = vunpack.c.l.bf16 %v164
    %v198 = vunpack.c.h.bf16 %v164
    %v199 = vunpack.c.l.bf16 %v165
    %v200 = vunpack.c.h.bf16 %v165
    %v201 = vunpack.c.l.bf16 %v166
    %v202 = vunpack.c.h.bf16 %v166
    %v203 = vunpack.c.l.bf16 %v167
    %v204 = vunpack.c.h.bf16 %v167
    %v205 = vunpack.c.l.bf16 %v168
    %v206 = vunpack.c.h.bf16 %v168
    %v207 = vunpack.c.l.bf16 %v169
    %v208 = vunpack.c.h.bf16 %v169
    %v209 = vunpack.c.l.bf16 %v170
    %v210 = vunpack.c.h.bf16 %v170
    %v211 = vunpack.c.l.bf16 %v171
    %v212 = vunpack.c.h.bf16 %v171
    %v213 = vunpack.c.l.bf16 %v172
    %v214 = vunpack.c.h.bf16 %v172
    %v215 = vunpack.c.l.bf16 %v173
    %v216 = vunpack.c.h.bf16 %v173
    %v217 = vunpack.c.l.bf16 %v174
    %v218 = vunpack.c.h.bf16 %v174
    %v219 = vunpack.c.l.bf16 %v175
    %v220 = vunpack.c.h.bf16 %v175
    %v221 = vunpack.c.l.bf16 %v176
    %v222 = vunpack.c.h.bf16 %v176
    %v223 = vunpack.c.l.bf16 %v177
    %v224 = vunpack.c.h.bf16 %v177
    %v225 = vunpack.c.l.bf16 %v178
    %v226 = vunpack.c.h.bf16 %v178
    %v227 = vunpack.c.l.bf16 %v179
    %v228 = vunpack.c.h.bf16 %v179
    %v229 = vunpack.c.l.bf16 %v180
    %v230 = vunpack.c.h.bf16 %v180
    %v231 = vunpack.c.l.bf16 %v181
    %v232 = vunpack.c.h.bf16 %v181
    %v233 = vunpack.c.l.bf16 %v182
    %v234 = vunpack.c.h.bf16 %v182
    %v235 = vunpack.c.l.bf16 %v183
    %v236 = vunpack.c.h.bf16 %v183
    %v237 = vunpack.c.l.bf16 %v184
    %v238 = vunpack.c.h.bf16 %v184
    %v239 = vunpack.c.l.bf16 %v185
    %v240 = vunpack.c.h.bf16 %v185
    %v241 = vunpack.c.l.bf16 %v186
    %v242 = vunpack.c.h.bf16 %v186
    %v243 = vunpack.c.l.bf16 %v187
    %v244 = vunpack.c.h.bf16 %v187
    %v245 = vunpack.c.l.bf16 %v188
    %v246 = vunpack.c.h.bf16 %v188
    %v247 = vunpack.c.l.bf16 %v189
    %v248 = vunpack.c.h.bf16 %v189
    %v249 = vunpack.c.l.bf16 %v190
    %v250 = vunpack.c.h.bf16 %v190
    %v251 = vunpack.c.l.bf16 %v191
    %v252 = vunpack.c.h.bf16 %v191
    %v253 = vunpack.c.l.bf16 %v192
    %v254 = vunpack.c.h.bf16 %v192
    %v255 = vunpack.c.l.bf16 %v193
    %v256 = vunpack.c.h.bf16 %v193
    %v257 = vunpack.c.l.bf16 %v194
    %v258 = vunpack.c.h.bf16 %v194
    %v259 = vld [vmem:[%s4] sm:$0xff]
    %260 = vmatprep.subr.mxu0 %v196
    %261 = vmatpush1.msra.mxu0 %v195
    %262 = vmatprep.subr.mxu0 %v200
    %263 = vmatpush1.msra.mxu0 %v199
    %264 = vmatprep.subr.mxu0 %v204
    %265 = vmatpush1.msra.mxu0 %v203
    %266 = vmatprep.subr.mxu0 %v208
    %267 = vmatpush1.msra.mxu0 %v207
    %268 = vmatprep.subr.mxu0 %v212
    %269 = vmatpush1.msra.mxu0 %v211
    %270 = vmatprep.subr.mxu0 %v216
    %271 = vmatpush1.msra.mxu0 %v215
    %272 = vmatprep.subr.mxu0 %v220
    %273 = vmatpush1.msra.mxu0 %v219
    %274 = vmatprep.subr.mxu0 %v224
    %275 = vmatpush1.msra.mxu0 %v223
    %276 = vmatprep.subr.mxu0 %v228
    %277 = vmatpush1.msra.mxu0 %v227
    %278 = vmatprep.subr.mxu0 %v232
    %279 = vmatpush1.msra.mxu0 %v231
    %280 = vmatprep.subr.mxu0 %v236
    %281 = vmatpush1.msra.mxu0 %v235
    %282 = vmatprep.subr.mxu0 %v240
    %283 = vmatpush1.msra.mxu0 %v239
    %284 = vmatprep.subr.mxu0 %v244
    %285 = vmatpush1.msra.mxu0 %v243
    %286 = vmatprep.subr.mxu0 %v248
    %287 = vmatpush1.msra.mxu0 %v247
    %288 = vmatprep.subr.mxu0 %v252
    %289 = vmatpush1.msra.mxu0 %v251
    %290 = vmatprep.subr.mxu0 %v256
    %291 = vmatpush1.msra.mxu0 %v255
    %292 = vmatprep.subr.mxu0 0.0
    %293 = vmatpush1.msra.mxu0 0.0
    %294 = vmatprep.subr.mxu0 0.0
    %295 = vmatpush1.msra.mxu0 0.0
    %296 = vmatprep.subr.mxu0 0.0
    %297 = vmatpush1.msra.mxu0 0.0
    %298 = vmatprep.subr.mxu0 0.0
    %299 = vmatpush1.msra.mxu0 0.0
    %300 = vmatprep.subr.mxu0 0.0
    %301 = vmatpush1.msra.mxu0 0.0
    %302 = vmatprep.subr.mxu0 0.0
    %303 = vmatpush1.msra.mxu0 0.0
    %304 = vmatprep.subr.mxu0 0.0
    %305 = vmatpush1.msra.mxu0 0.0
    %306 = vmatprep.subr.mxu0 0.0
    %307 = vmatpush1.msra.mxu0 0.0
    %308 = vmatprep.subr.mxu0 0.0
    %309 = vmatpush1.msra.mxu0 0.0
    %310 = vmatprep.subr.mxu0 0.0
    %311 = vmatpush1.msra.mxu0 0.0
    %312 = vmatprep.subr.mxu0 0.0
    %313 = vmatpush1.msra.mxu0 0.0
    %314 = vmatprep.subr.mxu0 0.0
    %315 = vmatpush1.msra.mxu0 0.0
    %316 = vmatprep.subr.mxu0 0.0
    %317 = vmatpush1.msra.mxu0 0.0
    %318 = vmatprep.subr.mxu0 0.0
    %319 = vmatpush1.msra.mxu0 0.0
    %320 = vmatprep.subr.mxu0 0.0
    %321 = vmatpush1.msra.mxu0 0.0
    %322 = vmatprep.subr.mxu0 0.0
    %323 = vmatpush1.msra.mxu0 0.0
    %324 = vmatprep.mubr.f32.mxu0 0.0
    %325 = vmatmul.mubr.f32.gmra.mrb[0].mxu0 %v259
    %v326 = vpop.f32.mrb[0].mxu0
    %v327 = vadd.f32 0.0, %v326
    %v328 = vpop.f32.mrb[0].mxu0
    %v329 = vadd.f32 0.0, %v328
    %330 = vdwg.mxu0
    %331 = vmatprep.subr.mxu0 %v198
    %332 = vmatpush1.msra.mxu0 %v197
    %333 = vmatprep.subr.mxu0 %v202
    %334 = vmatpush1.msra.mxu0 %v201
    %335 = vmatprep.subr.mxu0 %v206
    %336 = vmatpush1.msra.mxu0 %v205
    %337 = vmatprep.subr.mxu0 %v210
    %338 = vmatpush1.msra.mxu0 %v209
    %339 = vmatprep.subr.mxu0 %v214
    %340 = vmatpush1.msra.mxu0 %v213
    %341 = vmatprep.subr.mxu0 %v218
    %342 = vmatpush1.msra.mxu0 %v217
    %343 = vmatprep.subr.mxu0 %v222
    %344 = vmatpush1.msra.mxu0 %v221
    %345 = vmatprep.subr.mxu0 %v226
    %346 = vmatpush1.msra.mxu0 %v225
    %347 = vmatprep.subr.mxu0 %v230
    %348 = vmatpush1.msra.mxu0 %v229
    %349 = vmatprep.subr.mxu0 %v234
    %350 = vmatpush1.msra.mxu0 %v233
    %351 = vmatprep.subr.mxu0 %v238
    %352 = vmatpush1.msra.mxu0 %v237
    %353 = vmatprep.subr.mxu0 %v242
    %354 = vmatpush1.msra.mxu0 %v241
    %355 = vmatprep.subr.mxu0 %v246
    %356 = vmatpush1.msra.mxu0 %v245
    %357 = vmatprep.subr.mxu0 %v250
    %358 = vmatpush1.msra.mxu0 %v249
    %359 = vmatprep.subr.mxu0 %v254
    %360 = vmatpush1.msra.mxu0 %v253
    %361 = vmatprep.subr.mxu0 %v258
    %362 = vmatpush1.msra.mxu0 %v257
    %363 = vmatprep.subr.mxu0 0.0
    %364 = vmatpush1.msra.mxu0 0.0
    %365 = vmatprep.subr.mxu0 0.0
    %366 = vmatpush1.msra.mxu0 0.0
    %367 = vmatprep.subr.mxu0 0.0
    %368 = vmatpush1.msra.mxu0 0.0
    %369 = vmatprep.subr.mxu0 0.0
    %370 = vmatpush1.msra.mxu0 0.0
    %371 = vmatprep.subr.mxu0 0.0
    %372 = vmatpush1.msra.mxu0 0.0
    %373 = vmatprep.subr.mxu0 0.0
    %374 = vmatpush1.msra.mxu0 0.0
    %375 = vmatprep.subr.mxu0 0.0
    %376 = vmatpush1.msra.mxu0 0.0
    %377 = vmatprep.subr.mxu0 0.0
    %378 = vmatpush1.msra.mxu0 0.0
    %379 = vmatprep.subr.mxu0 0.0
    %380 = vmatpush1.msra.mxu0 0.0
    %381 = vmatprep.subr.mxu0 0.0
    %382 = vmatpush1.msra.mxu0 0.0
    %383 = vmatprep.subr.mxu0 0.0
    %384 = vmatpush1.msra.mxu0 0.0
    %385 = vmatprep.subr.mxu0 0.0
    %386 = vmatpush1.msra.mxu0 0.0
    %387 = vmatprep.subr.mxu0 0.0
    %388 = vmatpush1.msra.mxu0 0.0
    %389 = vmatprep.subr.mxu0 0.0
    %390 = vmatpush1.msra.mxu0 0.0
    %391 = vmatprep.subr.mxu0 0.0
    %392 = vmatpush1.msra.mxu0 0.0
    %393 = vmatprep.subr.mxu0 0.0
    %394 = vmatpush1.msra.mxu0 0.0
    %395 = vmatprep.mubr.f32.mxu0 0.0
    %396 = vmatmul.mubr.f32.gmra.mrb[0].mxu0 %v259
    %v397 = vpop.f32.mrb[0].mxu0
    %v398 = vadd.f32 0.0, %v397
    %v399 = vpop.f32.mrb[0].mxu0
    %v400 = vadd.f32 0.0, %v399
    %401 = vdwg.mxu0
    %403 = vset.pattern.permute.xlu0 4
    %404 = vperm.xlu0 %403, %v158
    %v405 = vpop.permute.xlu0 %404
    %v407 = vmul.f32 %v259, %v405
    %408 = vset.pattern.permute.xlu0 0
    %409 = vperm.xlu0 %408, %v158
    %v410 = vpop.permute.xlu0 %409
    %v412 = vmul.f32 %v327, %v410
    %v413 = vadd.f32 %v407, %v412
    %414 = vset.pattern.permute.xlu0 1
    %415 = vperm.xlu0 %414, %v158
    %v416 = vpop.permute.xlu0 %415
    %v418 = vmul.f32 %v329, %v416
    %v419 = vadd.f32 %v413, %v418
    %420 = vset.pattern.permute.xlu0 2
    %421 = vperm.xlu0 %420, %v158
    %v422 = vpop.permute.xlu0 %421
    %v424 = vmul.f32 %v398, %v422
    %v425 = vadd.f32 %v419, %v424
    %426 = vset.pattern.permute.xlu0 3
    %427 = vperm.xlu0 %426, %v158
    %v428 = vpop.permute.xlu0 %427
    %v430 = vmul.f32 %v400, %v428
    %v431 = vadd.f32 %v425, %v430
    %432 = vmatprep.subr.mxu0 %v196
    %433 = vmatpush1.msra.mxu0 %v195
    %434 = vmatprep.subr.mxu0 %v200
    %435 = vmatpush1.msra.mxu0 %v199
    %436 = vmatprep.subr.mxu0 %v204
    %437 = vmatpush1.msra.mxu0 %v203
    %438 = vmatprep.subr.mxu0 %v208
    %439 = vmatpush1.msra.mxu0 %v207
    %440 = vmatprep.subr.mxu0 %v212
    %441 = vmatpush1.msra.mxu0 %v211
    %442 = vmatprep.subr.mxu0 %v216
    %443 = vmatpush1.msra.mxu0 %v215
    %444 = vmatprep.subr.mxu0 %v220
    %445 = vmatpush1.msra.mxu0 %v219
    %446 = vmatprep.subr.mxu0 %v224
    %447 = vmatpush1.msra.mxu0 %v223
    %448 = vmatprep.subr.mxu0 %v228
    %449 = vmatpush1.msra.mxu0 %v227
    %450 = vmatprep.subr.mxu0 %v232
    %451 = vmatpush1.msra.mxu0 %v231
    %452 = vmatprep.subr.mxu0 %v236
    %453 = vmatpush1.msra.mxu0 %v235
    %454 = vmatprep.subr.mxu0 %v240
    %455 = vmatpush1.msra.mxu0 %v239
    %456 = vmatprep.subr.mxu0 %v244
    %457 = vmatpush1.msra.mxu0 %v243
    %458 = vmatprep.subr.mxu0 %v248
    %459 = vmatpush1.msra.mxu0 %v247
    %460 = vmatprep.subr.mxu0 %v252
    %461 = vmatpush1.msra.mxu0 %v251
    %462 = vmatprep.subr.mxu0 %v256
    %463 = vmatpush1.msra.mxu0 %v255
    %464 = vmatprep.subr.mxu0 0.0
    %465 = vmatpush1.msra.mxu0 0.0
    %466 = vmatprep.subr.mxu0 0.0
    %467 = vmatpush1.msra.mxu0 0.0
    %468 = vmatprep.subr.mxu0 0.0
    %469 = vmatpush1.msra.mxu0 0.0
    %470 = vmatprep.subr.mxu0 0.0
    %471 = vmatpush1.msra.mxu0 0.0
    %472 = vmatprep.subr.mxu0 0.0
    %473 = vmatpush1.msra.mxu0 0.0
    %474 = vmatprep.subr.mxu0 0.0
    %475 = vmatpush1.msra.mxu0 0.0
    %476 = vmatprep.subr.mxu0 0.0
    %477 = vmatpush1.msra.mxu0 0.0
    %478 = vmatprep.subr.mxu0 0.0
    %479 = vmatpush1.msra.mxu0 0.0
    %480 = vmatprep.subr.mxu0 0.0
    %481 = vmatpush1.msra.mxu0 0.0
    %482 = vmatprep.subr.mxu0 0.0
    %483 = vmatpush1.msra.mxu0 0.0
    %484 = vmatprep.subr.mxu0 0.0
    %485 = vmatpush1.msra.mxu0 0.0
    %486 = vmatprep.subr.mxu0 0.0
    %487 = vmatpush1.msra.mxu0 0.0
    %488 = vmatprep.subr.mxu0 0.0
    %489 = vmatpush1.msra.mxu0 0.0
    %490 = vmatprep.subr.mxu0 0.0
    %491 = vmatpush1.msra.mxu0 0.0
    %492 = vmatprep.subr.mxu0 0.0
    %493 = vmatpush1.msra.mxu0 0.0
    %494 = vmatprep.subr.mxu0 0.0
    %495 = vmatpush1.msra.mxu0 0.0
    %496 = vmatprep.mubr.f32.mxu0 0.0
    %497 = vmatmul.mubr.f32.gmra.mrb[0].mxu0 %v431
    %v498 = vpop.f32.mrb[0].mxu0
    %v499 = vadd.f32 0.0, %v498
    %v500 = vpop.f32.mrb[0].mxu0
    %v501 = vadd.f32 0.0, %v500
    %502 = vdwg.mxu0
    %503 = vmatprep.subr.mxu0 %v198
    %504 = vmatpush1.msra.mxu0 %v197
    %505 = vmatprep.subr.mxu0 %v202
    %506 = vmatpush1.msra.mxu0 %v201
    %507 = vmatprep.subr.mxu0 %v206
    %508 = vmatpush1.msra.mxu0 %v205
    %509 = vmatprep.subr.mxu0 %v210
    %510 = vmatpush1.msra.mxu0 %v209
    %511 = vmatprep.subr.mxu0 %v214
    %512 = vmatpush1.msra.mxu0 %v213
    %513 = vmatprep.subr.mxu0 %v218
    %514 = vmatpush1.msra.mxu0 %v217
    %515 = vmatprep.subr.mxu0 %v222
    %516 = vmatpush1.msra.mxu0 %v221
    %517 = vmatprep.subr.mxu0 %v226
    %518 = vmatpush1.msra.mxu0 %v225
    %519 = vmatprep.subr.mxu0 %v230
    %520 = vmatpush1.msra.mxu0 %v229
    %521 = vmatprep.subr.mxu0 %v234
    %522 = vmatpush1.msra.mxu0 %v233
    %523 = vmatprep.subr.mxu0 %v238
    %524 = vmatpush1.msra.mxu0 %v237
    %525 = vmatprep.subr.mxu0 %v242
    %526 = vmatpush1.msra.mxu0 %v241
    %527 = vmatprep.subr.mxu0 %v246
    %528 = vmatpush1.msra.mxu0 %v245
    %529 = vmatprep.subr.mxu0 %v250
    %530 = vmatpush1.msra.mxu0 %v249
    %531 = vmatprep.subr.mxu0 %v254
    %532 = vmatpush1.msra.mxu0 %v253
    %533 = vmatprep.subr.mxu0 %v258
    %534 = vmatpush1.msra.mxu0 %v257
    %535 = vmatprep.subr.mxu0 0.0
    %536 = vmatpush1.msra.mxu0 0.0
    %537 = vmatprep.subr.mxu0 0.0
    %538 = vmatpush1.msra.mxu0 0.0
    %539 = vmatprep.subr.mxu0 0.0
    %540 = vmatpush1.msra.mxu0 0.0
    %541 = vmatprep.subr.mxu0 0.0
    %542 = vmatpush1.msra.mxu0 0.0
    %543 = vmatprep.subr.mxu0 0.0
    %544 = vmatpush1.msra.mxu0 0.0
    %545 = vmatprep.subr.mxu0 0.0
    %546 = vmatpush1.msra.mxu0 0.0
    %547 = vmatprep.subr.mxu0 0.0
    %548 = vmatpush1.msra.mxu0 0.0
    %549 = vmatprep.subr.mxu0 0.0
    %550 = vmatpush1.msra.mxu0 0.0
    %551 = vmatprep.subr.mxu0 0.0
    %552 = vmatpush1.msra.mxu0 0.0
    %553 = vmatprep.subr.mxu0 0.0
    %554 = vmatpush1.msra.mxu0 0.0
    %555 = vmatprep.subr.mxu0 0.0
    %556 = vmatpush1.msra.mxu0 0.0
    %557 = vmatprep.subr.mxu0 0.0
    %558 = vmatpush1.msra.mxu0 0.0
    %559 = vmatprep.subr.mxu0 0.0
    %560 = vmatpush1.msra.mxu0 0.0
    %561 = vmatprep.subr.mxu0 0.0
    %562 = vmatpush1.msra.mxu0 0.0
    %563 = vmatprep.subr.mxu0 0.0
    %564 = vmatpush1.msra.mxu0 0.0
    %565 = vmatprep.subr.mxu0 0.0
    %566 = vmatpush1.msra.mxu0 0.0
    %567 = vmatprep.mubr.f32.mxu0 0.0
    %568 = vmatmul.mubr.f32.gmra.mrb[0].mxu0 %v431
    %v569 = vpop.f32.mrb[0].mxu0
    %v570 = vadd.f32 0.0, %v569
    %v571 = vpop.f32.mrb[0].mxu0
    %v572 = vadd.f32 0.0, %v571
    %573 = vdwg.mxu0
    %575 = vset.pattern.permute.xlu0 4
    %576 = vperm.xlu0 %575, %v160
    %v577 = vpop.permute.xlu0 %576
    %v579 = vmul.f32 %v431, %v577
    %580 = vset.pattern.permute.xlu0 0
    %581 = vperm.xlu0 %580, %v160
    %v582 = vpop.permute.xlu0 %581
    %v584 = vmul.f32 %v499, %v582
    %v585 = vadd.f32 %v579, %v584
    %586 = vset.pattern.permute.xlu0 1
    %587 = vperm.xlu0 %586, %v160
    %v588 = vpop.permute.xlu0 %587
    %v590 = vmul.f32 %v501, %v588
    %v591 = vadd.f32 %v585, %v590
    %592 = vset.pattern.permute.xlu0 2
    %593 = vperm.xlu0 %592, %v160
    %v594 = vpop.permute.xlu0 %593
    %v596 = vmul.f32 %v570, %v594
    %v597 = vadd.f32 %v591, %v596
    %598 = vset.pattern.permute.xlu0 3
    %599 = vperm.xlu0 %598, %v160
    %v600 = vpop.permute.xlu0 %599
    %v602 = vmul.f32 %v572, %v600
    %v603 = vadd.f32 %v597, %v602
    %604 = vmatprep.subr.mxu0 %v196
    %605 = vmatpush1.msra.mxu0 %v195
    %606 = vmatprep.subr.mxu0 %v200
    %607 = vmatpush1.msra.mxu0 %v199
    %608 = vmatprep.subr.mxu0 %v204
    %609 = vmatpush1.msra.mxu0 %v203
    %610 = vmatprep.subr.mxu0 %v208
    %611 = vmatpush1.msra.mxu0 %v207
    %612 = vmatprep.subr.mxu0 %v212
    %613 = vmatpush1.msra.mxu0 %v211
    %614 = vmatprep.subr.mxu0 %v216
    %615 = vmatpush1.msra.mxu0 %v215
    %616 = vmatprep.subr.mxu0 %v220
    %617 = vmatpush1.msra.mxu0 %v219
    %618 = vmatprep.subr.mxu0 %v224
    %619 = vmatpush1.msra.mxu0 %v223
    %620 = vmatprep.subr.mxu0 %v228
    %621 = vmatpush1.msra.mxu0 %v227
    %622 = vmatprep.subr.mxu0 %v232
    %623 = vmatpush1.msra.mxu0 %v231
    %624 = vmatprep.subr.mxu0 %v236
    %625 = vmatpush1.msra.mxu0 %v235
    %626 = vmatprep.subr.mxu0 %v240
    %627 = vmatpush1.msra.mxu0 %v239
    %628 = vmatprep.subr.mxu0 %v244
    %629 = vmatpush1.msra.mxu0 %v243
    %630 = vmatprep.subr.mxu0 %v248
    %631 = vmatpush1.msra.mxu0 %v247
    %632 = vmatprep.subr.mxu0 %v252
    %633 = vmatpush1.msra.mxu0 %v251
    %634 = vmatprep.subr.mxu0 %v256
    %635 = vmatpush1.msra.mxu0 %v255
    %636 = vmatprep.subr.mxu0 0.0
    %637 = vmatpush1.msra.mxu0 0.0
    %638 = vmatprep.subr.mxu0 0.0
    %639 = vmatpush1.msra.mxu0 0.0
    %640 = vmatprep.subr.mxu0 0.0
    %641 = vmatpush1.msra.mxu0 0.0
    %642 = vmatprep.subr.mxu0 0.0
    %643 = vmatpush1.msra.mxu0 0.0
    %644 = vmatprep.subr.mxu0 0.0
    %645 = vmatpush1.msra.mxu0 0.0
    %646 = vmatprep.subr.mxu0 0.0
    %647 = vmatpush1.msra.mxu0 0.0
    %648 = vmatprep.subr.mxu0 0.0
    %649 = vmatpush1.msra.mxu0 0.0
    %650 = vmatprep.subr.mxu0 0.0
    %651 = vmatpush1.msra.mxu0 0.0
    %652 = vmatprep.subr.mxu0 0.0
    %653 = vmatpush1.msra.mxu0 0.0
    %654 = vmatprep.subr.mxu0 0.0
    %655 = vmatpush1.msra.mxu0 0.0
    %656 = vmatprep.subr.mxu0 0.0
    %657 = vmatpush1.msra.mxu0 0.0
    %658 = vmatprep.subr.mxu0 0.0
    %659 = vmatpush1.msra.mxu0 0.0
    %660 = vmatprep.subr.mxu0 0.0
    %661 = vmatpush1.msra.mxu0 0.0
    %662 = vmatprep.subr.mxu0 0.0
    %663 = vmatpush1.msra.mxu0 0.0
    %664 = vmatprep.subr.mxu0 0.0
    %665 = vmatpush1.msra.mxu0 0.0
    %666 = vmatprep.subr.mxu0 0.0
    %667 = vmatpush1.msra.mxu0 0.0
    %668 = vmatprep.mubr.f32.mxu0 0.0
    %669 = vmatmul.mubr.f32.gmra.mrb[0].mxu0 %v603
    %v670 = vpop.f32.mrb[0].mxu0
    %v671 = vadd.f32 0.0, %v670
    %v672 = vpop.f32.mrb[0].mxu0
    %v673 = vadd.f32 0.0, %v672
    %674 = vdwg.mxu0
    %675 = vmatprep.subr.mxu0 %v198
    %676 = vmatpush1.msra.mxu0 %v197
    %677 = vmatprep.subr.mxu0 %v202
    %678 = vmatpush1.msra.mxu0 %v201
    %679 = vmatprep.subr.mxu0 %v206
    %680 = vmatpush1.msra.mxu0 %v205
    %681 = vmatprep.subr.mxu0 %v210
    %682 = vmatpush1.msra.mxu0 %v209
    %683 = vmatprep.subr.mxu0 %v214
    %684 = vmatpush1.msra.mxu0 %v213
    %685 = vmatprep.subr.mxu0 %v218
    %686 = vmatpush1.msra.mxu0 %v217
    %687 = vmatprep.subr.mxu0 %v222
    %688 = vmatpush1.msra.mxu0 %v221
    %689 = vmatprep.subr.mxu0 %v226
    %690 = vmatpush1.msra.mxu0 %v225
    %691 = vmatprep.subr.mxu0 %v230
    %692 = vmatpush1.msra.mxu0 %v229
    %693 = vmatprep.subr.mxu0 %v234
    %694 = vmatpush1.msra.mxu0 %v233
    %695 = vmatprep.subr.mxu0 %v238
    %696 = vmatpush1.msra.mxu0 %v237
    %697 = vmatprep.subr.mxu0 %v242
    %698 = vmatpush1.msra.mxu0 %v241
    %699 = vmatprep.subr.mxu0 %v246
    %700 = vmatpush1.msra.mxu0 %v245
    %701 = vmatprep.subr.mxu0 %v250
    %702 = vmatpush1.msra.mxu0 %v249
    %703 = vmatprep.subr.mxu0 %v254
    %704 = vmatpush1.msra.mxu0 %v253
    %705 = vmatprep.subr.mxu0 %v258
    %706 = vmatpush1.msra.mxu0 %v257
    %707 = vmatprep.subr.mxu0 0.0
    %708 = vmatpush1.msra.mxu0 0.0
    %709 = vmatprep.subr.mxu0 0.0
    %710 = vmatpush1.msra.mxu0 0.0
    %711 = vmatprep.subr.mxu0 0.0
    %712 = vmatpush1.msra.mxu0 0.0
    %713 = vmatprep.subr.mxu0 0.0
    %714 = vmatpush1.msra.mxu0 0.0
    %715 = vmatprep.subr.mxu0 0.0
    %716 = vmatpush1.msra.mxu0 0.0
    %717 = vmatprep.subr.mxu0 0.0
    %718 = vmatpush1.msra.mxu0 0.0
    %719 = vmatprep.subr.mxu0 0.0
    %720 = vmatpush1.msra.mxu0 0.0
    %721 = vmatprep.subr.mxu0 0.0
    %722 = vmatpush1.msra.mxu0 0.0
    %723 = vmatprep.subr.mxu0 0.0
    %724 = vmatpush1.msra.mxu0 0.0
    %725 = vmatprep.subr.mxu0 0.0
    %726 = vmatpush1.msra.mxu0 0.0
    %727 = vmatprep.subr.mxu0 0.0
    %728 = vmatpush1.msra.mxu0 0.0
    %729 = vmatprep.subr.mxu0 0.0
    %730 = vmatpush1.msra.mxu0 0.0
    %731 = vmatprep.subr.mxu0 0.0
    %732 = vmatpush1.msra.mxu0 0.0
    %733 = vmatprep.subr.mxu0 0.0
    %734 = vmatpush1.msra.mxu0 0.0
    %735 = vmatprep.subr.mxu0 0.0
    %736 = vmatpush1.msra.mxu0 0.0
    %737 = vmatprep.subr.mxu0 0.0
    %738 = vmatpush1.msra.mxu0 0.0
    %739 = vmatprep.mubr.f32.mxu0 0.0
    %740 = vmatmul.mubr.f32.gmra.mrb[0].mxu0 %v603
    %v741 = vpop.f32.mrb[0].mxu0
    %v742 = vadd.f32 0.0, %v741
    %v743 = vpop.f32.mrb[0].mxu0
    %v744 = vadd.f32 0.0, %v743
    %745 = vdwg.mxu0
    %747 = vset.pattern.permute.xlu0 4
    %748 = vperm.xlu0 %747, %v162
    %v749 = vpop.permute.xlu0 %748
    %v751 = vmul.f32 %v603, %v749
    %752 = vset.pattern.permute.xlu0 0
    %753 = vperm.xlu0 %752, %v162
    %v754 = vpop.permute.xlu0 %753
    %v756 = vmul.f32 %v671, %v754
    %v757 = vadd.f32 %v751, %v756
    %758 = vset.pattern.permute.xlu0 1
    %759 = vperm.xlu0 %758, %v162
    %v760 = vpop.permute.xlu0 %759
    %v762 = vmul.f32 %v673, %v760
    %v763 = vadd.f32 %v757, %v762
    %764 = vset.pattern.permute.xlu0 2
    %765 = vperm.xlu0 %764, %v162
    %v766 = vpop.permute.xlu0 %765
    %v768 = vmul.f32 %v742, %v766
    %v769 = vadd.f32 %v763, %v768
    %770 = vset.pattern.permute.xlu0 3
    %771 = vperm.xlu0 %770, %v162
    %v772 = vpop.permute.xlu0 %771
    %v774 = vmul.f32 %v744, %v772
    %v775 = vadd.f32 %v769, %v774
    %776 = vadd.xlane.f32.xlu0 %v775
    %v777 = vpop.xlane.xlu0 %776
    %v778 = vmax.f32 %v777, 1e-20
    %v779 = vrcp.pop %v778
    %v780 = vmul.f32 %v775, %v779
    %v782 = vrot.slane %v780, 2
    %v784 = vadd.f32 %v780, %v782
    %785 = vst [vmem:[#allocation2] sm:$0x3] %v784
    // Predicated region
    $region22: #{rule_miner_forward.1} parent=1 // pred_check
      _
    $region23: #{rule_miner_forward.1} parent=1 // pred_check_branch
      %787 = sbr.rel (0) target = $region25
    $region24: #{rule_miner_forward.1} parent=1 // pred_region
      %s789 = ssub.s32 32, 32
      %790 = vsyncadd [#allocation3], %s789
      %s792 = sshll.u32 [#allocation2], 4
      %s793 = int_to_ptr.vmem [resolvable:$true] %s792
      %795 = dma.vmem_to_hbm [thread:$0]  %s793, 32, %s5, [#allocation3]
    $region25: #{rule_miner_forward.1} parent=1 // pred_fallthru
      _
    // Predicated region
    $region26: #{rule_miner_forward.1} parent=1 // pred_check
      _
    $region27: #{rule_miner_forward.1} parent=1 // pred_check_branch
      %797 = sbr.rel (0) target = $region29
    $region28: #{rule_miner_forward.1} parent=1 // pred_region
      %798 = dma.done [#allocation3], 32
    $region29: #{rule_miner_forward.1} parent=1 // pred_fallthru
      _
    %799 = vsyncpa [#allocation3], 1

</llo_original>
